<compile_context>
chip_gen: v5e
topology: v5e:2x2
jax: 0.10.0
libtpu: 0.0.40
codegen_flags: <defaults>
</compile_context>

<pallas_src>
import jax
import jax.numpy as jnp
from jax.experimental import pallas as pl
from jax.experimental.pallas import tpu as pltpu

_LANE_COLS = 1024                 # lane-dense slab width (8 * 128)
_DEFAULT_TILE_BUDGET = 4 << 20    # ~4 MiB of x per tile
_VMEM_LIMIT_BYTES = 32 << 20      # safe scoped-VMEM limit on v5e/v6e/v7x


def _affine_kernel(a_ref, b_ref, x_ref, o_ref):
    # a_ref / b_ref: (1,) scalars in SMEM; x_ref / o_ref: (tile_rows, 1024) VMEM tiles.
    a = a_ref[0]
    b = b_ref[0]
    o_ref[...] = (a + b * x_ref[...]).astype(o_ref.dtype)


def manual_linear_regression(x, a, b, *, tile_budget_bytes=_DEFAULT_TILE_BUDGET):
    """out = a + b * x with scalar (1,) parameters a, b broadcast over x (any shape)."""
    orig_shape = x.shape
    orig_dtype = x.dtype

    # --- wrapper-side lane-dense reshape ------------------------------------
    total = x.size
    padded = pl.cdiv(total, _LANE_COLS) * _LANE_COLS
    x_flat = x.reshape(-1)
    if padded != total:
        x_flat = jnp.pad(x_flat, (0, padded - total))
    rows = padded // _LANE_COLS
    x2 = x_flat.reshape(rows, _LANE_COLS)

    # --- byte-budgeted, feat-aware tile selection ---------------------------
    bytes_per_row = _LANE_COLS * x2.dtype.itemsize
    tile_rows = max(8, ((tile_budget_bytes // bytes_per_row) // 8) * 8)
    if tile_rows >= rows:
        tile_rows = rows          # single block covering the full dim
        grid = (1,)
    else:
        grid = (pl.cdiv(rows, tile_rows),)

    out2 = pl.pallas_call(
        _affine_kernel,
        out_shape=jax.ShapeDtypeStruct((rows, _LANE_COLS), orig_dtype),
        grid=grid,
        in_specs=[
            pl.BlockSpec(memory_space=pltpu.SMEM),                 # a (scalar)
            pl.BlockSpec(memory_space=pltpu.SMEM),                 # b (scalar)
            pl.BlockSpec((tile_rows, _LANE_COLS), lambda i: (i, 0)),  # x tile
        ],
        out_specs=pl.BlockSpec((tile_rows, _LANE_COLS), lambda i: (i, 0)),
        compiler_params=pltpu.CompilerParams(
            dimension_semantics=("parallel",),
            vmem_limit_bytes=_VMEM_LIMIT_BYTES,
        ),
    )(a, b, x2)

    # Undo the layout plumbing: strip padding and restore the caller's shape.
    return out2.reshape(-1)[:total].reshape(orig_shape)


if __name__ == "__main__":
    key = jax.random.PRNGKey(0)
    kx, ka, kb, kx2 = jax.random.split(key, 4)

    # Deterministic "torch.randn(1)"-style parameters.
    a = jax.random.normal(ka, (1,), dtype=jnp.float32)
    b = jax.random.normal(kb, (1,), dtype=jnp.float32)

    # Realistic ManualLinearRegression input: (N, 1) column vector.
    x = jax.random.normal(kx, (100, 1), dtype=jnp.float32)
    out = jax.block_until_ready(manual_linear_regression(x, a, b))
    ref = a + b * x
    assert out.shape == x.shape and out.dtype == x.dtype
    assert jnp.allclose(out, ref, atol=1e-6, rtol=1e-6)

    # Wider input with a tiny tile budget so the multi-step grid path runs too.
    x2 = jax.random.normal(kx2, (64, 256), dtype=jnp.float32)
    out2 = jax.block_until_ready(
        manual_linear_regression(x2, a, b, tile_budget_bytes=32 << 10)
    )
    assert out2.shape == x2.shape and out2.dtype == x2.dtype
    assert jnp.allclose(out2, a + b * x2, atol=1e-6, rtol=1e-6)

    print("KERNEL_OK")
</pallas_src>

<mosaic_0001>
module attributes {stable_mosaic.version = 11 : i64} {
  func.func @_affine_kernel(%arg0: i32, %arg1: memref<1xf32, #tpu.memory_space<smem>>, %arg2: memref<1xf32, #tpu.memory_space<smem>>, %arg3: memref<1x1024xf32, #tpu.memory_space<vmem>>, %arg4: memref<1x1024xf32, #tpu.memory_space<vmem>>) attributes {dimension_semantics = [#tpu.dimension_semantics<parallel>], iteration_bounds = array<i64: 1>, scalar_prefetch = 0 : i64, scratch_operands = 0 : i64, tpu.core_type = #tpu.core_type<tc>, window_params = [{transform_indices = @transform_0, window_bounds = array<i64: 1>}, {transform_indices = @transform_1, window_bounds = array<i64: 1>}, {transform_indices = @transform_2, window_bounds = array<i64: 1, 1024>}, {transform_indices = @transform_3, window_bounds = array<i64: 1, 1024>}]} {
    %c0 = arith.constant 0 : index
    %0 = memref.load %arg1[%c0] : memref<1xf32, #tpu.memory_space<smem>>
    %c0_0 = arith.constant 0 : index
    %1 = memref.load %arg2[%c0_0] : memref<1xf32, #tpu.memory_space<smem>>
    %c0_1 = arith.constant 0 : index
    %c0_2 = arith.constant 0 : index
    %2 = vector.load %arg3[%c0_1, %c0_2] : memref<1x1024xf32, #tpu.memory_space<vmem>>, vector<1x1024xf32>
    %3 = vector.broadcast %1 : f32 to vector<1x1024xf32>
    %4 = arith.mulf %3, %2 : vector<1x1024xf32>
    %5 = vector.broadcast %0 : f32 to vector<1x1024xf32>
    %6 = arith.addf %5, %4 : vector<1x1024xf32>
    %c0_3 = arith.constant 0 : index
    %c0_4 = arith.constant 0 : index
    %7 = vector.load %arg4[%c0_3, %c0_4] : memref<1x1024xf32, #tpu.memory_space<vmem>>, vector<1x1024xf32>
    tpu.vector_store %arg4[%c0_3, %c0_4], %6 {strides = array<i32>} : memref<1x1024xf32, #tpu.memory_space<vmem>>, vector<1x1024xf32>,
    return
  }
  func.func @transform_0(%arg0: i32) -> i32 {
    %c0_i32 = arith.constant 0 : i32
    %c0_i32_0 = arith.constant 0 : i32
    return %c0_i32 : i32
  }
  func.func @transform_1(%arg0: i32) -> i32 {
    %c0_i32 = arith.constant 0 : i32
    %c0_i32_0 = arith.constant 0 : i32
    return %c0_i32 : i32
  }
  func.func @transform_2(%arg0: i32) -> (i32, i32) {
    %c0_i32 = arith.constant 0 : i32
    %c0_i32_0 = arith.constant 0 : i32
    return %arg0, %c0_i32 : i32, i32
  }
  func.func @transform_3(%arg0: i32) -> (i32, i32) {
    %c0_i32 = arith.constant 0 : i32
    %c0_i32_0 = arith.constant 0 : i32
    return %arg0, %c0_i32 : i32, i32
  }
}

</mosaic_0001>

<llo_original>
// kernel: tpu_custom_call.1
$region0: #{tpu_custom_call.1}
  #allocation0 [shape = 'u32[]', space=smem, size = 0x4, offset = 0x4, fixed_abs, tag = 'smem constant byte address 0x4 - core index']
  #allocation1 [shape = 'u32[72,128]{1,0:T(1,128)}', space=vmem, size = 0x9000, scoped, tag = 'internal scratch']
  #allocation2 [shape = 'f32[1]{0:T(128)S(6)}', space=smem, size = 0x200, scoped, tag = 'scoped memory for tpu_custom_call.1']
  #allocation3 [shape = 'f32[1]{0:T(128)S(6)}', space=smem, size = 0x200, scoped, tag = 'scoped memory for tpu_custom_call.1']
  %s0 = inlined_call_operand.<no memory space> [shape: f32[1], index: 0, kind: input, shape index: {}]
  %s1 = inlined_call_operand.<no memory space> [shape: f32[1], index: 1, kind: input, shape index: {}]
  %s2 = inlined_call_operand.hbm [shape: f32[1,1024], index: 2, kind: input, shape index: {}]
  %s3 = inlined_call_operand.hbm [shape: f32[1,1024], index: 3, kind: output, shape index: {}]
  %s4 = sld [smem:[#allocation0]]
  $region26: #{tpu_custom_call.1} parent=0
    _
  %s6 = ssub.s32 1, %s4
  %s7 = scalar_select 0, %s6, %s4
  %8 = sst [smem:[#allocation2]] %s0
  %9 = sst [smem:[#allocation3]] %s1
  $region1: #{tpu_custom_call.1} parent=0
    #allocation4 [shape = 'u8[4096]{0}', space=vmem, size = 0x1000, scoped, tag = 'input window, operand 2, single buffered']
    #allocation5 [shape = 's32[1]{0}', space=sflag, size = 0x4, scoped, tag = 'scoped memory for tpu_custom_call.1']
    #allocation6 [shape = 's32[1]{0}', space=sflag, size = 0x4, scoped, tag = 'scoped memory for tpu_custom_call.1']
    #allocation7 [shape = 'u8[4096]{0}', space=vmem, size = 0x1000, scoped, tag = 'output window, operand 0, single buffered']
    %10 = vsyncpa [#allocation5], 0
    %11 = vsyncpa [#allocation6], 0
    // Predicated region
    $region2: #{tpu_custom_call.1} parent=1 // pred_check
      _
    $region3: #{tpu_custom_call.1} parent=1 // pred_check_branch
      %13 = sbr.rel (0) target = $region5
    $region4: #{tpu_custom_call.1} parent=1 // pred_region
      _
    $region5: #{tpu_custom_call.1} parent=1 // pred_fallthru
      _
    // Predicated region
    $region6: #{tpu_custom_call.1} parent=1 // pred_check
      _
    $region7: #{tpu_custom_call.1} parent=1 // pred_check_branch
      %15 = sbr.rel (0) target = $region9
    $region8: #{tpu_custom_call.1} parent=1 // pred_region
      _
    $region9: #{tpu_custom_call.1} parent=1 // pred_fallthru
      _
    // Predicated region
    $region10: #{tpu_custom_call.1} parent=1 // pred_check
      _
    $region11: #{tpu_custom_call.1} parent=1 // pred_check_branch
      %17 = sbr.rel (0) target = $region13
    $region12: #{tpu_custom_call.1} parent=1 // pred_region
      %19 = vsyncadd [#allocation5], 0
      %s21 = sshll.u32 %s2, 4
      %s22 = int_to_ptr.hbm [resolvable:$true] %s21
      %s23 = sshll.u32 [#allocation4], 4
      %s24 = int_to_ptr.vmem [resolvable:$true] %s23
      %26 = dma.hbm_to_vmem [thread:$0]  %s22, 128, %s24, [#allocation5]
    $region13: #{tpu_custom_call.1} parent=1 // pred_fallthru
      _
    // Predicated region
    $region14: #{tpu_custom_call.1} parent=1 // pred_check
      _
    $region15: #{tpu_custom_call.1} parent=1 // pred_check_branch
      %28 = sbr.rel (0) target = $region17
    $region16: #{tpu_custom_call.1} parent=1 // pred_region
      %30 = dma.done [#allocation5], 128
    $region17: #{tpu_custom_call.1} parent=1 // pred_fallthru
      _
    %s31 = sld [smem:[#allocation2]]
    %s32 = sld [smem:[#allocation3]]
    %v33 = vld [vmem:[#allocation4] sm:$0xff]
    %v34 = vstv %s32
    %v35 = vmul.f32 %v34, %v33
    %v36 = vstv %s31
    %v37 = vadd.f32 %v36, %v35
    %38 = vst [vmem:[#allocation7] sm:$0xff] %v37
    // Predicated region
    $region18: #{tpu_custom_call.1} parent=1 // pred_check
      _
    $region19: #{tpu_custom_call.1} parent=1 // pred_check_branch
      %40 = sbr.rel (0) target = $region21
    $region20: #{tpu_custom_call.1} parent=1 // pred_region
      %42 = vsyncadd [#allocation6], 0
      %s44 = sshll.u32 [#allocation7], 4
      %s45 = int_to_ptr.vmem [resolvable:$true] %s44
      %s46 = sshll.u32 %s3, 4
      %s47 = int_to_ptr.hbm [resolvable:$true] %s46
      %49 = dma.vmem_to_hbm [thread:$0]  %s45, 128, %s47, [#allocation6]
    $region21: #{tpu_custom_call.1} parent=1 // pred_fallthru
      _
    // Predicated region
    $region22: #{tpu_custom_call.1} parent=1 // pred_check
      _
    $region23: #{tpu_custom_call.1} parent=1 // pred_check_branch
      %51 = sbr.rel (0) target = $region25
    $region24: #{tpu_custom_call.1} parent=1 // pred_region
      %53 = dma.done [#allocation6], 128
    $region25: #{tpu_custom_call.1} parent=1 // pred_fallthru
      _
    %54 = vsyncpa [#allocation5], 1
    %55 = vsyncpa [#allocation6], 1

</llo_original>
